<compile_context>
chip_gen: v5e
topology: v5e:2x2
jax: 0.10.0
libtpu: 0.0.40
codegen_flags: <defaults>
</compile_context>

<pallas_src>
import functools
import math

import jax
import jax.numpy as jnp
from jax.experimental import pallas as pl
from jax.experimental.pallas import tpu as pltpu


def masked_attention_kernel(x_ref, wqkv_ref, bqkv_ref, wp_ref, bp_ref, bias_ref,
                            o_ref, *, n_heads):
    """One grid step == one block of batches, fully resident in VMEM."""
    N, C = x_ref.shape                     # N = batch_block * T token rows
    H = n_heads
    D = C // H
    M = H * N                              # packed rows, ordered (head, batch, time)
    scale = 1.0 / math.sqrt(D)

    x = x_ref[...].astype(jnp.bfloat16)    # (N, C) bf16 MXU operand

    # ---- Fused QKV projection: ONE MXU call, f32 accumulation + f32 bias. ----
    qkv = jnp.dot(x, wqkv_ref[...], preferred_element_type=jnp.float32)
    qkv = qkv + bqkv_ref[...]              # (N, 3C) f32

    # ---- Head split: in-register lane-slices packed along sublanes (no VMEM
    #      scratch, no masked narrow stores, no per-head matmul loop). Each
    #      contiguous run of T packed rows is one (batch, head) attention block. ----
    def pack_heads(base):
        return jnp.concatenate(
            [qkv[:, base + h * D: base + (h + 1) * D] for h in range(H)], axis=0)

    q = pack_heads(0).astype(jnp.bfloat16)         # (M, D)
    k = pack_heads(C).astype(jnp.bfloat16)         # (M, D)
    v = pack_heads(2 * C).astype(jnp.bfloat16)     # (M, D)

    # ---- Scores for ALL (batch, head) blocks with ONE MXU matmul (contraction on
    #      D, no explicit K transpose). bias_ref holds the combined causal +
    #      cross-block -1e30 additive mask (precomputed once, like the module's
    #      registered tril buffer). ----
    s = jnp.einsum('md,nd->mn', q, k,
                   preferred_element_type=jnp.float32) * scale + bias_ref[...]

    # ---- Softmax in f32 (v5e-safe); divide -> EUP approximate reciprocal. ----
    m = jnp.max(s, axis=-1, keepdims=True)
    p = jnp.exp(s - m)
    p = p * pl.reciprocal(jnp.sum(p, axis=-1, keepdims=True), approx=True)

    # ---- A = softmax(S) @ V for all blocks: ONE MXU matmul. Masked (cross-block)
    #      probabilities are exactly zero, so the packed contraction is exact. ----
    a = jnp.einsum('mn,nd->md', p.astype(jnp.bfloat16), v,
                   preferred_element_type=jnp.float32)             # (M, D) f32

    # ---- Re-pack heads onto lanes (H tiny lane-concats) and do the output
    #      projection as ONE depth-C MXU matmul. ----
    attn = jnp.concatenate([a[h * N:(h + 1) * N, :] for h in range(H)], axis=1)
    out = jnp.dot(attn.astype(jnp.bfloat16), wp_ref[...],
                  preferred_element_type=jnp.float32) + bp_ref[...]   # (N, C) f32

    o_ref[...] = out.astype(o_ref.dtype)


def pack_params(params):
    """One-time weight packing (do at module init, NOT per forward call)."""
    wq, bq, wk, bk, wv, bv, wp, bp = params
    wqkv = jnp.concatenate([wq, wk, wv], axis=1).astype(jnp.bfloat16)   # (C, 3C)
    bqkv = jnp.concatenate([bq, bk, bv], axis=1).astype(jnp.float32)    # (1, 3C)
    return wqkv, bqkv, wp.astype(jnp.bfloat16), bp.astype(jnp.float32)


def masked_attention(x, packed_params, n_heads, batch_block=None):
    """Causal MHA forward. `batch_block` = batches handled per grid step.

    Default folds the whole batch into ONE grid step (minimizes per-step overhead;
    v5e/v6e have a single TensorCore). On v7x (2 TensorCores) pass
    batch_block = ceil(B / 2) at larger batch sizes so the 'parallel' grid axis has
    extent >= 2 and both cores are fed.
    """
    B, T, C = x.shape
    H = n_heads
    D = C // H
    Bb = B if batch_block is None else batch_block
    assert B % Bb == 0, "batch_block must divide B"
    wqkv, bqkv, wp, bp = packed_params

    N = Bb * T              # token rows per grid step
    M = H * N               # packed (head, batch, time) rows per grid step

    # Combined causal + (batch, head) block-diagonal additive mask. Packed row index
    # i = (h*Bb + b)*T + t, so same-block <=> i//T == j//T and causal <=> i%T >= j%T.
    # Built purely from iota => constant-folds under jit (no per-call cost).
    ri = jnp.arange(M, dtype=jnp.int32)[:, None]
    ci = jnp.arange(M, dtype=jnp.int32)[None, :]
    allow = (ri // T == ci // T) & (ri % T >= ci % T)
    attn_bias = jnp.where(allow, 0.0, -1e30).astype(jnp.float32)        # (M, M)

    x2 = x.reshape(B * T, C)       # free (contiguous) metadata reshape

    flops = 2 * ((B * T) * C * 4 * C               # QKV + output projections
                 + 2 * (B // Bb) * M * M * D)      # packed scores + AV matmuls
    transcendentals = (B // Bb) * M * M
    bytes_accessed = (2 * x.size * x.dtype.itemsize
                      + wqkv.size * wqkv.dtype.itemsize
                      + bqkv.size * bqkv.dtype.itemsize
                      + wp.size * wp.dtype.itemsize
                      + bp.size * bp.dtype.itemsize
                      + attn_bias.size * attn_bias.dtype.itemsize)

    out2 = pl.pallas_call(
        functools.partial(masked_attention_kernel, n_heads=n_heads),
        out_shape=jax.ShapeDtypeStruct((B * T, C), x.dtype),
        grid_spec=pltpu.PrefetchScalarGridSpec(
            num_scalar_prefetch=0,
            grid=(B // Bb,),
            in_specs=[
                pl.BlockSpec((N, C), lambda i: (i, 0)),        # x rows of this block
                pl.BlockSpec((C, 3 * C), lambda i: (0, 0)),    # fused QKV weight (bf16)
                pl.BlockSpec((1, 3 * C), lambda i: (0, 0)),    # fused QKV bias (f32)
                pl.BlockSpec((C, C), lambda i: (0, 0)),        # proj weight (bf16)
                pl.BlockSpec((1, C), lambda i: (0, 0)),        # proj bias (f32)
                pl.BlockSpec((M, M), lambda i: (0, 0)),        # causal/block mask (f32)
            ],
            out_specs=pl.BlockSpec((N, C), lambda i: (i, 0)),
        ),
        compiler_params=pltpu.CompilerParams(
            dimension_semantics=("parallel",),
            # Actual footprint ~60 KiB; keep reservation small so neighboring
            # fusions retain headroom (v7x has only 64 MiB physical VMEM).
            vmem_limit_bytes=4 * 1024 * 1024,
        ),
        cost_estimate=pl.CostEstimate(
            flops=flops, transcendentals=transcendentals,
            bytes_accessed=bytes_accessed),
    )(x2, wqkv, bqkv, wp, bp, attn_bias)

    return out2.reshape(B, T, C)


def reference_attention(x, params, n_heads):
    """Pure-JAX f32 reference mirroring the PyTorch forward (eval mode)."""
    wq, bq, wk, bk, wv, bv, wp, bp = params
    B, T, C = x.shape
    D = C // n_heads

    def heads(y):  # (B,T,C) -> (B,N,T,D)
        return y.reshape(B, T, n_heads, D).transpose(0, 2, 1, 3)

    Q = heads(x @ wq + bq)
    K = heads(x @ wk + bk)
    V = heads(x @ wv + bv)

    w = jnp.einsum('bntd,bnsd->bnts', Q, K) / math.sqrt(D)
    mask = jnp.tril(jnp.ones((T, T)))[None, None]
    w = jnp.where(mask == 0, -jnp.inf, w)
    p = jax.nn.softmax(w, axis=-1)
    A = jnp.einsum('bnts,bnsd->bntd', p, V)
    attn = A.transpose(0, 2, 1, 3).reshape(B, T, C)
    return attn @ wp + bp


def init_linear(key, c_in, c_out):
    """Match nn.Linear default init (uniform +/- 1/sqrt(fan_in))."""
    k1, k2 = jax.random.split(key)
    bound = 1.0 / math.sqrt(c_in)
    w = jax.random.uniform(k1, (c_in, c_out), jnp.float32, -bound, bound)
    b = jax.random.uniform(k2, (1, c_out), jnp.float32, -bound, bound)
    return w, b


if __name__ == "__main__":
    B, T, C = 2, 8, 32
    n_heads = 4          # D = 8
    max_T = 8            # T == max_T; causal mask realized as a precomputed additive bias

    key = jax.random.PRNGKey(0)
    kx, kq, kk, kv, kp = jax.random.split(key, 5)

    x = jax.random.normal(kx, (B, T, C), jnp.float32)
    wq, bq = init_linear(kq, C, C)
    wk, bk = init_linear(kk, C, C)
    wv, bv = init_linear(kv, C, C)
    wp, bp = init_linear(kp, C, C)
    params = (wq, bq, wk, bk, wv, bv, wp, bp)

    # One-time packing (== module init); keeps concat/cast HLOs off the per-call path.
    packed = jax.block_until_ready(pack_params(params))

    attn_fn = jax.jit(functools.partial(masked_attention, n_heads=n_heads))
    out = jax.block_until_ready(attn_fn(x, packed))

    ref = reference_attention(x, params, n_heads)
    assert out.shape == (B, T, C)
    # bf16 MXU operands + approx reciprocal => relaxed tolerance vs the f32 reference.
    assert jnp.allclose(out, ref, atol=3e-2, rtol=3e-2), "mismatch vs reference"

    print("KERNEL_OK")
</pallas_src>

<mosaic_0001>
module attributes {stable_mosaic.version = 11 : i64} {
  func.func @masked_attention_kernel(%arg0: i32, %arg1: memref<16x32xf32, #tpu.memory_space<vmem>>, %arg2: memref<32x96xbf16, #tpu.memory_space<vmem>>, %arg3: memref<1x96xf32, #tpu.memory_space<vmem>>, %arg4: memref<32x32xbf16, #tpu.memory_space<vmem>>, %arg5: memref<1x32xf32, #tpu.memory_space<vmem>>, %arg6: memref<64x64xf32, #tpu.memory_space<vmem>>, %arg7: memref<16x32xf32, #tpu.memory_space<vmem>>) attributes {dimension_semantics = [#tpu.dimension_semantics<parallel>], iteration_bounds = array<i64: 1>, scalar_prefetch = 0 : i64, scratch_operands = 0 : i64, tpu.core_type = #tpu.core_type<tc>, window_params = [{transform_indices = @transform_0, window_bounds = array<i64: 16, 32>}, {pipeline_mode = #tpu.pipeline_mode<synchronous>, transform_indices = @transform_1, window_bounds = array<i64: 32, 96>}, {pipeline_mode = #tpu.pipeline_mode<synchronous>, transform_indices = @transform_2, window_bounds = array<i64: 1, 96>}, {pipeline_mode = #tpu.pipeline_mode<synchronous>, transform_indices = @transform_3, window_bounds = array<i64: 32, 32>}, {pipeline_mode = #tpu.pipeline_mode<synchronous>, transform_indices = @transform_4, window_bounds = array<i64: 1, 32>}, {pipeline_mode = #tpu.pipeline_mode<synchronous>, transform_indices = @transform_5, window_bounds = array<i64: 64, 64>}, {transform_indices = @transform_6, window_bounds = array<i64: 16, 32>}]} {
    %c0 = arith.constant 0 : index
    %c0_0 = arith.constant 0 : index
    %0 = vector.load %arg1[%c0, %c0_0] : memref<16x32xf32, #tpu.memory_space<vmem>>, vector<16x32xf32>
    %1 = arith.truncf %0 : vector<16x32xf32> to vector<16x32xbf16>
    %c0_1 = arith.constant 0 : index
    %c0_2 = arith.constant 0 : index
    %2 = vector.load %arg2[%c0_1, %c0_2] : memref<32x96xbf16, #tpu.memory_space<vmem>>, vector<32x96xbf16>
    %cst = arith.constant dense<0.000000e+00> : vector<16x96xf32>
    %3 = tpu.matmul %1, %2, %cst {dimension_numbers = #tpu.dot_dimension_numbers<[1], [0], [0], [1], [0, 0, 1, 1], [], []>} : vector<16x32xbf16>, vector<32x96xbf16>, vector<16x96xf32> -> vector<16x96xf32>
    %c0_3 = arith.constant 0 : index
    %c0_4 = arith.constant 0 : index
    %4 = vector.load %arg3[%c0_3, %c0_4] : memref<1x96xf32, #tpu.memory_space<vmem>>, vector<1x96xf32>
    %5 = vector.broadcast %4 : vector<1x96xf32> to vector<16x96xf32>
    %6 = arith.addf %3, %5 : vector<16x96xf32>
    %7 = vector.extract_strided_slice %6 {offsets = [0, 0], sizes = [16, 8], strides = [1, 1]} : vector<16x96xf32> to vector<16x8xf32>
    %8 = vector.extract_strided_slice %6 {offsets = [0, 8], sizes = [16, 8], strides = [1, 1]} : vector<16x96xf32> to vector<16x8xf32>
    %9 = vector.extract_strided_slice %6 {offsets = [0, 16], sizes = [16, 8], strides = [1, 1]} : vector<16x96xf32> to vector<16x8xf32>
    %10 = vector.extract_strided_slice %6 {offsets = [0, 24], sizes = [16, 8], strides = [1, 1]} : vector<16x96xf32> to vector<16x8xf32>
    %11 = tpu.concatenate %7, %8, %9, %10 in 0 : vector<16x8xf32>, vector<16x8xf32>, vector<16x8xf32>, vector<16x8xf32> -> vector<64x8xf32>
    %12 = arith.truncf %11 : vector<64x8xf32> to vector<64x8xbf16>
    %13 = vector.extract_strided_slice %6 {offsets = [0, 32], sizes = [16, 8], strides = [1, 1]} : vector<16x96xf32> to vector<16x8xf32>
    %14 = vector.extract_strided_slice %6 {offsets = [0, 40], sizes = [16, 8], strides = [1, 1]} : vector<16x96xf32> to vector<16x8xf32>
    %15 = vector.extract_strided_slice %6 {offsets = [0, 48], sizes = [16, 8], strides = [1, 1]} : vector<16x96xf32> to vector<16x8xf32>
    %16 = vector.extract_strided_slice %6 {offsets = [0, 56], sizes = [16, 8], strides = [1, 1]} : vector<16x96xf32> to vector<16x8xf32>
    %17 = tpu.concatenate %13, %14, %15, %16 in 0 : vector<16x8xf32>, vector<16x8xf32>, vector<16x8xf32>, vector<16x8xf32> -> vector<64x8xf32>
    %18 = arith.truncf %17 : vector<64x8xf32> to vector<64x8xbf16>
    %19 = vector.extract_strided_slice %6 {offsets = [0, 64], sizes = [16, 8], strides = [1, 1]} : vector<16x96xf32> to vector<16x8xf32>
    %20 = vector.extract_strided_slice %6 {offsets = [0, 72], sizes = [16, 8], strides = [1, 1]} : vector<16x96xf32> to vector<16x8xf32>
    %21 = vector.extract_strided_slice %6 {offsets = [0, 80], sizes = [16, 8], strides = [1, 1]} : vector<16x96xf32> to vector<16x8xf32>
    %22 = vector.extract_strided_slice %6 {offsets = [0, 88], sizes = [16, 8], strides = [1, 1]} : vector<16x96xf32> to vector<16x8xf32>
    %23 = tpu.concatenate %19, %20, %21, %22 in 0 : vector<16x8xf32>, vector<16x8xf32>, vector<16x8xf32>, vector<16x8xf32> -> vector<64x8xf32>
    %24 = arith.truncf %23 : vector<64x8xf32> to vector<64x8xbf16>
    "tpu.trace_start"() <{level = 10 : i32, message = "md,nd->mn"}> : () -> ()
    %cst_5 = arith.constant dense<0.000000e+00> : vector<64x64xf32>
    %25 = tpu.matmul %12, %18, %cst_5 {dimension_numbers = #tpu.dot_dimension_numbers<[1], [1], [0], [0], [0, 0, 1, 0], [], []>} : vector<64x8xbf16>, vector<64x8xbf16>, vector<64x64xf32> -> vector<64x64xf32>
    "tpu.trace_stop"() : () -> ()
    %cst_6 = arith.constant 0.353553385 : f32
    %26 = vector.broadcast %cst_6 : f32 to vector<64x64xf32>
    %27 = arith.mulf %25, %26 : vector<64x64xf32>
    %c0_7 = arith.constant 0 : index
    %c0_8 = arith.constant 0 : index
    %28 = vector.load %arg6[%c0_7, %c0_8] : memref<64x64xf32, #tpu.memory_space<vmem>>, vector<64x64xf32>
    %29 = arith.addf %27, %28 : vector<64x64xf32>
    %cst_9 = arith.constant dense<0xFF800000> : vector<64xf32>
    %30 = vector.multi_reduction <maximumf>, %29, %cst_9 [1] : vector<64x64xf32> to vector<64xf32>
    %31 = vector.shape_cast %30 : vector<64xf32> to vector<64x1xf32>
    %32 = vector.broadcast %31 : vector<64x1xf32> to vector<64x64xf32>
    %33 = arith.subf %29, %32 : vector<64x64xf32>
    %34 = math.exp %33 : vector<64x64xf32>
    %cst_10 = arith.constant dense<0.000000e+00> : vector<64xf32>
    %35 = vector.multi_reduction <add>, %34, %cst_10 [1] : vector<64x64xf32> to vector<64xf32>
    %36 = vector.shape_cast %35 : vector<64xf32> to vector<64x1xf32>
    %37 = tpu.reciprocal %36 {approx = true} : vector<64x1xf32> -> vector<64x1xf32>
    %38 = vector.broadcast %37 : vector<64x1xf32> to vector<64x64xf32>
    %39 = arith.mulf %34, %38 : vector<64x64xf32>
    %40 = arith.truncf %39 : vector<64x64xf32> to vector<64x64xbf16>
    "tpu.trace_start"() <{level = 10 : i32, message = "mn,nd->md"}> : () -> ()
    %cst_11 = arith.constant dense<0.000000e+00> : vector<64x8xf32>
    %41 = tpu.matmul %40, %24, %cst_11 {dimension_numbers = #tpu.dot_dimension_numbers<[1], [0], [0], [1], [0, 0, 1, 1], [], []>} : vector<64x64xbf16>, vector<64x8xbf16>, vector<64x8xf32> -> vector<64x8xf32>
    "tpu.trace_stop"() : () -> ()
    %42 = vector.extract_strided_slice %41 {offsets = [0, 0], sizes = [16, 8], strides = [1, 1]} : vector<64x8xf32> to vector<16x8xf32>
    %43 = vector.extract_strided_slice %41 {offsets = [16, 0], sizes = [16, 8], strides = [1, 1]} : vector<64x8xf32> to vector<16x8xf32>
    %44 = vector.extract_strided_slice %41 {offsets = [32, 0], sizes = [16, 8], strides = [1, 1]} : vector<64x8xf32> to vector<16x8xf32>
    %45 = vector.extract_strided_slice %41 {offsets = [48, 0], sizes = [16, 8], strides = [1, 1]} : vector<64x8xf32> to vector<16x8xf32>
    %46 = tpu.concatenate %42, %43, %44, %45 in 1 : vector<16x8xf32>, vector<16x8xf32>, vector<16x8xf32>, vector<16x8xf32> -> vector<16x32xf32>
    %47 = arith.truncf %46 : vector<16x32xf32> to vector<16x32xbf16>
    %c0_12 = arith.constant 0 : index
    %c0_13 = arith.constant 0 : index
    %48 = vector.load %arg4[%c0_12, %c0_13] : memref<32x32xbf16, #tpu.memory_space<vmem>>, vector<32x32xbf16>
    %cst_14 = arith.constant dense<0.000000e+00> : vector<16x32xf32>
    %49 = tpu.matmul %47, %48, %cst_14 {dimension_numbers = #tpu.dot_dimension_numbers<[1], [0], [0], [1], [0, 0, 1, 1], [], []>} : vector<16x32xbf16>, vector<32x32xbf16>, vector<16x32xf32> -> vector<16x32xf32>
    %c0_15 = arith.constant 0 : index
    %c0_16 = arith.constant 0 : index
    %50 = vector.load %arg5[%c0_15, %c0_16] : memref<1x32xf32, #tpu.memory_space<vmem>>, vector<1x32xf32>
    %51 = vector.broadcast %50 : vector<1x32xf32> to vector<16x32xf32>
    %52 = arith.addf %49, %51 : vector<16x32xf32>
    %c0_17 = arith.constant 0 : index
    %c0_18 = arith.constant 0 : index
    %53 = vector.load %arg7[%c0_17, %c0_18] : memref<16x32xf32, #tpu.memory_space<vmem>>, vector<16x32xf32>
    tpu.vector_store %arg7[%c0_17, %c0_18], %52 {strides = array<i32>} : memref<16x32xf32, #tpu.memory_space<vmem>>, vector<16x32xf32>,
    return
  }
  func.func @transform_0(%arg0: i32) -> (i32, i32) {
    %c0_i32 = arith.constant 0 : i32
    %c0_i32_0 = arith.constant 0 : i32
    return %arg0, %c0_i32 : i32, i32
  }
  func.func @transform_1(%arg0: i32) -> (i32, i32) {
    %c0_i32 = arith.constant 0 : i32
    %c0_i32_0 = arith.constant 0 : i32
    %c0_i32_1 = arith.constant 0 : i32
    return %c0_i32, %c0_i32_0 : i32, i32
  }
  func.func @transform_2(%arg0: i32) -> (i32, i32) {
    %c0_i32 = arith.constant 0 : i32
    %c0_i32_0 = arith.constant 0 : i32
    %c0_i32_1 = arith.constant 0 : i32
    return %c0_i32, %c0_i32_0 : i32, i32
  }
  func.func @transform_3(%arg0: i32) -> (i32, i32) {
    %c0_i32 = arith.constant 0 : i32
    %c0_i32_0 = arith.constant 0 : i32
    %c0_i32_1 = arith.constant 0 : i32
    return %c0_i32, %c0_i32_0 : i32, i32
  }
  func.func @transform_4(%arg0: i32) -> (i32, i32) {
    %c0_i32 = arith.constant 0 : i32
    %c0_i32_0 = arith.constant 0 : i32
    %c0_i32_1 = arith.constant 0 : i32
    return %c0_i32, %c0_i32_0 : i32, i32
  }
  func.func @transform_5(%arg0: i32) -> (i32, i32) {
    %c0_i32 = arith.constant 0 : i32
    %c0_i32_0 = arith.constant 0 : i32
    %c0_i32_1 = arith.constant 0 : i32
    return %c0_i32, %c0_i32_0 : i32, i32
  }
  func.func @transform_6(%arg0: i32) -> (i32, i32) {
    %c0_i32 = arith.constant 0 : i32
    %c0_i32_0 = arith.constant 0 : i32
    return %arg0, %c0_i32 : i32, i32
  }
}

</mosaic_0001>

<llo_original>
// kernel: masked_attention.1
$region0: #{masked_attention.1}
  #allocation0 [shape = 'u32[]', space=smem, size = 0x4, offset = 0x4, fixed_abs, tag = 'smem constant byte address 0x4 - core index']
  #allocation1 [shape = 'u32[72,128]{1,0:T(1,128)}', space=vmem, size = 0x9000, scoped, tag = 'internal scratch']
  %s0 = inlined_call_operand.vmem [shape: f32[16,32], index: 0, kind: input, shape index: {}]
  %s1 = inlined_call_operand.vmem [shape: bf16[32,96], index: 1, kind: input, shape index: {}]
  %s2 = inlined_call_operand.vmem [shape: f32[1,96], index: 2, kind: input, shape index: {}]
  %s3 = inlined_call_operand.vmem [shape: bf16[32,32], index: 3, kind: input, shape index: {}]
  %s4 = inlined_call_operand.vmem [shape: f32[1,32], index: 4, kind: input, shape index: {}]
  %s5 = inlined_call_operand.vmem [shape: f32[64,64], index: 5, kind: input, shape index: {}]
  %s6 = inlined_call_operand.hbm [shape: f32[16,32], index: 6, kind: output, shape index: {}]
  %s7 = sld [smem:[#allocation0]]
  $region34: #{masked_attention.1} parent=0
    _
  %s9 = ssub.s32 1, %s7
  %s10 = scalar_select 0, %s9, %s7
  $region1: #{masked_attention.1} parent=0
    #allocation2 [shape = 'u8[8192]{0}', space=vmem, size = 0x2000, scoped, tag = 'output window, operand 0, single buffered']
    #allocation3 [shape = 's32[1]{0}', space=sflag, size = 0x4, scoped, tag = 'scoped memory for masked_attention.1']
    %11 = vsyncpa [#allocation3], 0
    // Predicated region
    $region2: #{masked_attention.1} parent=1 // pred_check
      _
    $region3: #{masked_attention.1} parent=1 // pred_check_branch
      %13 = sbr.rel (0) target = $region5
    $region4: #{masked_attention.1} parent=1 // pred_region
      _
    $region5: #{masked_attention.1} parent=1 // pred_fallthru
      _
    // Predicated region
    $region6: #{masked_attention.1} parent=1 // pred_check
      _
    $region7: #{masked_attention.1} parent=1 // pred_check_branch
      %15 = sbr.rel (0) target = $region9
    $region8: #{masked_attention.1} parent=1 // pred_region
      _
    $region9: #{masked_attention.1} parent=1 // pred_fallthru
      _
    // Predicated region
    $region10: #{masked_attention.1} parent=1 // pred_check
      _
    $region11: #{masked_attention.1} parent=1 // pred_check_branch
      %17 = sbr.rel (0) target = $region13
    $region12: #{masked_attention.1} parent=1 // pred_region
      _
    $region13: #{masked_attention.1} parent=1 // pred_fallthru
      _
    // Predicated region
    $region14: #{masked_attention.1} parent=1 // pred_check
      _
    $region15: #{masked_attention.1} parent=1 // pred_check_branch
      %19 = sbr.rel (0) target = $region17
    $region16: #{masked_attention.1} parent=1 // pred_region
      _
    $region17: #{masked_attention.1} parent=1 // pred_fallthru
      _
    // Predicated region
    $region18: #{masked_attention.1} parent=1 // pred_check
      _
    $region19: #{masked_attention.1} parent=1 // pred_check_branch
      %21 = sbr.rel (0) target = $region21
    $region20: #{masked_attention.1} parent=1 // pred_region
      _
    $region21: #{masked_attention.1} parent=1 // pred_fallthru
      _
    // Predicated region
    $region22: #{masked_attention.1} parent=1 // pred_check
      _
    $region23: #{masked_attention.1} parent=1 // pred_check_branch
      %23 = sbr.rel (0) target = $region25
    $region24: #{masked_attention.1} parent=1 // pred_region
      _
    $region25: #{masked_attention.1} parent=1 // pred_fallthru
      _
    %v25 = vld [vmem:[%s0] sm:$0xff]
    %v26 = vld [vmem:[%s0 + $0x8] sm:$0xff]
    %v27 = vpack.c.bf16 %v26, %v25
    %v28 = vld [vmem:[%s1] sm:$0xf]
    %v29 = vld [vmem:[%s1 + $0x4] sm:$0xf]
    %v30 = vld [vmem:[%s1 + $0x8] sm:$0xf]
    %v31 = vld [vmem:[%s1 + $0xc] sm:$0xf]
    %v32 = vld [vmem:[%s2] sm:$0x1]
    %v34 = vperm.slane %v32, 0
    %v40 = vunpack.c.l.b16 %v28
    %v41 = vunpack.c.l.b16 %v29
    %v42 = vunpack.c.l.b16 %v30
    %v43 = vunpack.c.l.b16 %v31
    %v44 = vpack.c.b16 %v41, %v40
    %v45 = vpack.c.b16 %v43, %v42
    %vm48 = vcmask 261120
    %v50 = vsel %vm48, %v27, 0
    %52 = vmatpush.bf16.msra.mxu0 0
    %53 = vmatpush.bf16.msra.mxu0 0
    %54 = vmatpush.bf16.msra.mxu0 0
    %55 = vmatpush.bf16.msra.mxu0 0
    %56 = vmatpush.bf16.msra.mxu0 0
    %57 = vmatpush.bf16.msra.mxu0 0
    %58 = vmatpush.bf16.msra.mxu0 %v45
    %59 = vmatpush.bf16.msra.mxu0 %v44
    %60 = vmatmul.bf16.gmra.mxu0 %v50
    %v61 = vpop.f32.mrf.mxu0
    %v62 = vadd.f32 %v34, %v61
    %v63 = vpop.f32.mrf.mxu0
    %v64 = vadd.f32 %v34, %v63
    %65 = vdwg.mxu0
    %68 = vrot.lane.b32.xlu0 %v62, 120
    %v69 = vpop.permute.xlu0 %68
    %70 = vrot.lane.b32.xlu0 %v64, 120
    %v71 = vpop.permute.xlu0 %70
    %74 = vrot.lane.b32.xlu0 %v62, 112
    %v75 = vpop.permute.xlu0 %74
    %76 = vrot.lane.b32.xlu0 %v64, 112
    %v77 = vpop.permute.xlu0 %76
    %80 = vrot.lane.b32.xlu0 %v62, 104
    %v81 = vpop.permute.xlu0 %80
    %82 = vrot.lane.b32.xlu0 %v64, 104
    %v83 = vpop.permute.xlu0 %82
    %v86 = vpack.c.bf16 %v64, %v62
    %v87 = vpack.c.bf16 %v71, %v69
    %v88 = vpack.c.bf16 %v77, %v75
    %v89 = vpack.c.bf16 %v83, %v81
    %94 = vrot.lane.b32.xlu0 %v86, 96
    %v95 = vpop.permute.xlu0 %94
    %96 = vrot.lane.b32.xlu0 %v87, 96
    %v97 = vpop.permute.xlu0 %96
    %98 = vrot.lane.b32.xlu0 %v88, 96
    %v99 = vpop.permute.xlu0 %98
    %100 = vrot.lane.b32.xlu0 %v89, 96
    %v101 = vpop.permute.xlu0 %100
    %vm102 = vcmask 64512
    %v104 = vsel %vm102, %v86, 0
    %v107 = vsel %vm102, %v87, 0
    %v110 = vsel %vm102, %v88, 0
    %v113 = vsel %vm102, %v89, 0
    %v116 = vsel %vm102, %v95, 0
    %v119 = vsel %vm102, %v97, 0
    %v122 = vsel %vm102, %v99, 0
    %v125 = vsel %vm102, %v101, 0
    %127 = vmatpush.bf16.xpose.msra.mxu0 0
    %128 = vmatpush.bf16.xpose.msra.mxu0 0
    %129 = vmatpush.bf16.xpose.msra.mxu0 0
    %130 = vmatpush.bf16.xpose.msra.mxu0 0
    %131 = vmatpush.bf16.xpose.msra.mxu0 %v125
    %132 = vmatpush.bf16.xpose.msra.mxu0 %v122
    %133 = vmatpush.bf16.xpose.msra.mxu0 %v119
    %134 = vmatpush.bf16.xpose.msra.mxu0 %v116
    %135 = vmatmul.bf16.gmra.mxu0 %v104
    %v136 = vpop.f32.mrf.mxu0
    %v137 = vadd.f32 0.0, %v136
    %v138 = vpop.f32.mrf.mxu0
    %v139 = vadd.f32 0.0, %v138
    %140 = vmatmul.bf16.gmra.mxu0 %v107
    %v141 = vpop.f32.mrf.mxu0
    %v142 = vadd.f32 0.0, %v141
    %v143 = vpop.f32.mrf.mxu0
    %v144 = vadd.f32 0.0, %v143
    %145 = vmatmul.bf16.gmra.mxu0 %v110
    %v146 = vpop.f32.mrf.mxu0
    %v147 = vadd.f32 0.0, %v146
    %v148 = vpop.f32.mrf.mxu0
    %v149 = vadd.f32 0.0, %v148
    %150 = vmatmul.bf16.gmra.mxu0 %v113
    %v151 = vpop.f32.mrf.mxu0
    %v152 = vadd.f32 0.0, %v151
    %v153 = vpop.f32.mrf.mxu0
    %v154 = vadd.f32 0.0, %v153
    %155 = vdwg.mxu0
    %v156 = vmul.f32 %v137, 0.35355338
    %v157 = vmul.f32 %v139, 0.35355338
    %v158 = vmul.f32 %v142, 0.35355338
    %v159 = vmul.f32 %v144, 0.35355338
    %v160 = vmul.f32 %v147, 0.35355338
    %v161 = vmul.f32 %v149, 0.35355338
    %v162 = vmul.f32 %v152, 0.35355338
    %v163 = vmul.f32 %v154, 0.35355338
    %v164 = vld [vmem:[%s5] sm:$0xff]
    %v165 = vld [vmem:[%s5 + $0x8] sm:$0xff]
    %v166 = vld [vmem:[%s5 + $0x10] sm:$0xff]
    %v167 = vld [vmem:[%s5 + $0x18] sm:$0xff]
    %v168 = vld [vmem:[%s5 + $0x20] sm:$0xff]
    %v169 = vld [vmem:[%s5 + $0x28] sm:$0xff]
    %v170 = vld [vmem:[%s5 + $0x30] sm:$0xff]
    %v171 = vld [vmem:[%s5 + $0x38] sm:$0xff]
    %v172 = vadd.f32 %v156, %v164
    %v173 = vadd.f32 %v157, %v165
    %v174 = vadd.f32 %v158, %v166
    %v175 = vadd.f32 %v159, %v167
    %v176 = vadd.f32 %v160, %v168
    %v177 = vadd.f32 %v161, %v169
    %v178 = vadd.f32 %v162, %v170
    %v179 = vadd.f32 %v163, %v171
    %vm180 = vcmask 523264
    %v181 = vsel %vm180, %v172, -inf
    %182 = vmax.xlane.f32.xlu0 %v181
    %v183 = vpop.xlane.xlu0 %182
    %v184 = vsel %vm180, %v173, -inf
    %185 = vmax.xlane.f32.xlu0 %v184
    %v186 = vpop.xlane.xlu0 %185
    %v187 = vsel %vm180, %v174, -inf
    %188 = vmax.xlane.f32.xlu0 %v187
    %v189 = vpop.xlane.xlu0 %188
    %v190 = vsel %vm180, %v175, -inf
    %191 = vmax.xlane.f32.xlu0 %v190
    %v192 = vpop.xlane.xlu0 %191
    %v193 = vsel %vm180, %v176, -inf
    %194 = vmax.xlane.f32.xlu0 %v193
    %v195 = vpop.xlane.xlu0 %194
    %v196 = vsel %vm180, %v177, -inf
    %197 = vmax.xlane.f32.xlu0 %v196
    %v198 = vpop.xlane.xlu0 %197
    %v199 = vsel %vm180, %v178, -inf
    %200 = vmax.xlane.f32.xlu0 %v199
    %v201 = vpop.xlane.xlu0 %200
    %v202 = vsel %vm180, %v179, -inf
    %203 = vmax.xlane.f32.xlu0 %v202
    %v204 = vpop.xlane.xlu0 %203
    %v205 = vsub.f32 %v172, %v183
    %v206 = vsub.f32 %v173, %v186
    %v207 = vsub.f32 %v174, %v189
    %v208 = vsub.f32 %v175, %v192
    %v209 = vsub.f32 %v176, %v195
    %v210 = vsub.f32 %v177, %v198
    %v211 = vsub.f32 %v178, %v201
    %v212 = vsub.f32 %v179, %v204
    %v213 = vmul.f32 %v205, 1.442695
    %v214 = vpow.pop %v213
    %v215 = vmul.f32 %v206, 1.442695
    %v216 = vpow.pop %v215
    %v217 = vmul.f32 %v207, 1.442695
    %v218 = vpow.pop %v217
    %v219 = vmul.f32 %v208, 1.442695
    %v220 = vpow.pop %v219
    %v221 = vmul.f32 %v209, 1.442695
    %v222 = vpow.pop %v221
    %v223 = vmul.f32 %v210, 1.442695
    %v224 = vpow.pop %v223
    %v225 = vmul.f32 %v211, 1.442695
    %v226 = vpow.pop %v225
    %v227 = vmul.f32 %v212, 1.442695
    %v228 = vpow.pop %v227
    %v229 = vsel %vm180, %v214, 0.0
    %230 = vadd.xlane.f32.xlu0 %v229
    %v231 = vpop.xlane.xlu0 %230
    %v232 = vsel %vm180, %v216, 0.0
    %233 = vadd.xlane.f32.xlu0 %v232
    %v234 = vpop.xlane.xlu0 %233
    %v235 = vsel %vm180, %v218, 0.0
    %236 = vadd.xlane.f32.xlu0 %v235
    %v237 = vpop.xlane.xlu0 %236
    %v238 = vsel %vm180, %v220, 0.0
    %239 = vadd.xlane.f32.xlu0 %v238
    %v240 = vpop.xlane.xlu0 %239
    %v241 = vsel %vm180, %v222, 0.0
    %242 = vadd.xlane.f32.xlu0 %v241
    %v243 = vpop.xlane.xlu0 %242
    %v244 = vsel %vm180, %v224, 0.0
    %245 = vadd.xlane.f32.xlu0 %v244
    %v246 = vpop.xlane.xlu0 %245
    %v247 = vsel %vm180, %v226, 0.0
    %248 = vadd.xlane.f32.xlu0 %v247
    %v249 = vpop.xlane.xlu0 %248
    %v250 = vsel %vm180, %v228, 0.0
    %251 = vadd.xlane.f32.xlu0 %v250
    %v252 = vpop.xlane.xlu0 %251
    %v253 = vrcp.pop %v231
    %v254 = vrcp.pop %v234
    %v255 = vrcp.pop %v237
    %v256 = vrcp.pop %v240
    %v257 = vrcp.pop %v243
    %v258 = vrcp.pop %v246
    %v259 = vrcp.pop %v249
    %v260 = vrcp.pop %v252
    %v261 = vmul.f32 %v214, %v253
    %v262 = vmul.f32 %v216, %v254
    %v263 = vmul.f32 %v218, %v255
    %v264 = vmul.f32 %v220, %v256
    %v265 = vmul.f32 %v222, %v257
    %v266 = vmul.f32 %v224, %v258
    %v267 = vmul.f32 %v226, %v259
    %v268 = vmul.f32 %v228, %v260
    %v269 = vpack.c.bf16 %v262, %v261
    %v270 = vpack.c.bf16 %v264, %v263
    %v271 = vpack.c.bf16 %v266, %v265
    %v272 = vpack.c.bf16 %v268, %v267
    %273 = vrot.lane.b32.xlu0 %v86, 64
    %v274 = vpop.permute.xlu0 %273
    %275 = vrot.lane.b32.xlu0 %v87, 64
    %v276 = vpop.permute.xlu0 %275
    %277 = vrot.lane.b32.xlu0 %v88, 64
    %v278 = vpop.permute.xlu0 %277
    %279 = vrot.lane.b32.xlu0 %v89, 64
    %v280 = vpop.permute.xlu0 %279
    %v286 = vsel %vm180, %v269, 0
    %v289 = vsel %vm180, %v270, 0
    %v292 = vsel %vm180, %v271, 0
    %v295 = vsel %vm180, %v272, 0
    %297 = vmatpush.bf16.msra.mxu0 0
    %298 = vmatpush.bf16.msra.mxu0 0
    %299 = vmatpush.bf16.msra.mxu0 0
    %300 = vmatpush.bf16.msra.mxu0 0
    %301 = vmatpush.bf16.msra.mxu0 %v280
    %302 = vmatpush.bf16.msra.mxu0 %v278
    %303 = vmatpush.bf16.msra.mxu0 %v276
    %304 = vmatpush.bf16.msra.mxu0 %v274
    %305 = vmatmul.bf16.gmra.mxu0 %v286
    %v306 = vpop.f32.mrf.mxu0
    %v307 = vadd.f32 0.0, %v306
    %v308 = vpop.f32.mrf.mxu0
    %v309 = vadd.f32 0.0, %v308
    %310 = vmatmul.bf16.gmra.mxu0 %v289
    %v311 = vpop.f32.mrf.mxu0
    %v312 = vadd.f32 0.0, %v311
    %v313 = vpop.f32.mrf.mxu0
    %v314 = vadd.f32 0.0, %v313
    %315 = vmatmul.bf16.gmra.mxu0 %v292
    %v316 = vpop.f32.mrf.mxu0
    %v317 = vadd.f32 0.0, %v316
    %v318 = vpop.f32.mrf.mxu0
    %v319 = vadd.f32 0.0, %v318
    %320 = vmatmul.bf16.gmra.mxu0 %v295
    %v321 = vpop.f32.mrf.mxu0
    %v322 = vadd.f32 0.0, %v321
    %v323 = vpop.f32.mrf.mxu0
    %v324 = vadd.f32 0.0, %v323
    %325 = vdwg.mxu0
    %328 = vrot.lane.b32.xlu0 %v312, 8
    %v329 = vpop.permute.xlu0 %328
    %330 = vrot.lane.b32.xlu0 %v314, 8
    %v331 = vpop.permute.xlu0 %330
    %336 = vrot.lane.b32.xlu0 %v317, 16
    %v337 = vpop.permute.xlu0 %336
    %338 = vrot.lane.b32.xlu0 %v319, 16
    %v339 = vpop.permute.xlu0 %338
    %344 = vrot.lane.b32.xlu0 %v322, 24
    %v345 = vpop.permute.xlu0 %344
    %346 = vrot.lane.b32.xlu0 %v324, 24
    %v347 = vpop.permute.xlu0 %346
    %v350 = vsel %vm102, %v307, %v329
    %v351 = vsel %vm102, %v309, %v331
    %vm352 = vcmask 130048
    %v353 = vsel %vm352, %v350, %v337
    %v354 = vsel %vm352, %v351, %v339
    %vm355 = vcmask 195584
    %v356 = vsel %vm355, %v353, %v345
    %v357 = vsel %vm355, %v354, %v347
    %v358 = vpack.c.bf16 %v357, %v356
    %v359 = vld [vmem:[%s3] sm:$0xf]
    %v360 = vld [vmem:[%s3 + $0x4] sm:$0xf]
    %v361 = vld [vmem:[%s3 + $0x8] sm:$0xf]
    %v362 = vld [vmem:[%s3 + $0xc] sm:$0xf]
    %v363 = vld [vmem:[%s4] sm:$0x1]
    %v365 = vperm.slane %v363, 0
    %v371 = vunpack.c.l.b16 %v359
    %v372 = vunpack.c.l.b16 %v360
    %v373 = vunpack.c.l.b16 %v361
    %v374 = vunpack.c.l.b16 %v362
    %v375 = vpack.c.b16 %v372, %v371
    %v376 = vpack.c.b16 %v374, %v373
    %v380 = vsel %vm48, %v358, 0
    %382 = vmatpush.bf16.msra.mxu0 0
    %383 = vmatpush.bf16.msra.mxu0 0
    %384 = vmatpush.bf16.msra.mxu0 0
    %385 = vmatpush.bf16.msra.mxu0 0
    %386 = vmatpush.bf16.msra.mxu0 0
    %387 = vmatpush.bf16.msra.mxu0 0
    %388 = vmatpush.bf16.msra.mxu0 %v376
    %389 = vmatpush.bf16.msra.mxu0 %v375
    %390 = vmatmul.bf16.gmra.mxu0 %v380
    %v391 = vpop.f32.mrf.mxu0
    %v392 = vadd.f32 %v365, %v391
    %v393 = vpop.f32.mrf.mxu0
    %v394 = vadd.f32 %v365, %v393
    %395 = vdwg.mxu0
    %396 = vst.msk [vmem:[#allocation2] sm:$0xff] %vm48, %v392
    %397 = vst.msk [vmem:[#allocation2 + $0x8] sm:$0xff] %vm48, %v394
    // Predicated region
    $region26: #{masked_attention.1} parent=1 // pred_check
      _
    $region27: #{masked_attention.1} parent=1 // pred_check_branch
      %399 = sbr.rel (0) target = $region29
    $region28: #{masked_attention.1} parent=1 // pred_region
      %401 = vsyncadd [#allocation3], 0
      %s402 = sshll.u32 [#allocation2], 4
      %s403 = int_to_ptr.vmem [resolvable:$true] %s402
      %s404 = sshll.u32 %s6, 4
      %s405 = int_to_ptr.hbm [resolvable:$true] %s404
      %410 = dma.vmem_to_hbm [thread:$0]  %s403, 256, %s405, [#allocation3], 128, 128, 8
    $region29: #{masked_attention.1} parent=1 // pred_fallthru
      _
    // Predicated region
    $region30: #{masked_attention.1} parent=1 // pred_check
      _
    $region31: #{masked_attention.1} parent=1 // pred_check_branch
      %412 = sbr.rel (0) target = $region33
    $region32: #{masked_attention.1} parent=1 // pred_region
      %414 = dma.done [#allocation3], 256
    $region33: #{masked_attention.1} parent=1 // pred_fallthru
      _
    %415 = vsyncpa [#allocation3], 1

</llo_original>
